<compile_context>
chip_gen: v5e
topology: v5e:2x2
jax: 0.10.0
libtpu: 0.0.40
codegen_flags: <defaults>
</compile_context>

<pallas_src>
import functools

import jax
import jax.numpy as jnp
from jax.experimental import pallas as pl
from jax.experimental.pallas import tpu as pltpu


def _dft_matrix(n, dtype=jnp.float32):
    """Real/imag parts of the n x n forward DFT matrix F[k,m] = exp(-2*pi*i*k*m/n)."""
    k = jnp.arange(n, dtype=jnp.float32)
    ang = -2.0 * jnp.pi * jnp.outer(k, k) / n
    return jnp.cos(ang).astype(dtype), jnp.sin(ang).astype(dtype)


def _fused_dft_2d(h, w, dtype=jnp.float32):
    """Real/imag parts of the fused (h*w) x (h*w) 2-D DFT matrix.

    For a row-major flattened image y_flat = vec_row(Y):
        vec_row(F_H @ Y @ F_W) = kron(F_H, F_W) @ y_flat.
    F_H and F_W are symmetric, so kron(F_H, F_W) is symmetric and a
    (batch, h*w) row layout can simply right-multiply by it.
    """
    fhr, fhi = _dft_matrix(h, dtype)
    if w == h:
        fwr, fwi = fhr, fhi                      # H == W: reuse the same DFT matrix
    else:
        fwr, fwi = _dft_matrix(w, dtype)
    f2r = jnp.kron(fhr, fwr) - jnp.kron(fhi, fwi)
    f2i = jnp.kron(fhr, fwi) + jnp.kron(fhi, fwr)
    return f2r, f2i


def _x_update_kernel(rho_ref, hth_ref, x0_ref, x1_ref, f2r_ref, f2i_ref,
                     out_ref, *, hw):
    rho1 = rho_ref[0]
    rho2 = rho_ref[1]

    # (1, hw) frequency-domain denominator.  Tiny (a couple of vregs), so it is
    # recomputed per grid step instead of a one-shot init under pl.when, which
    # would be unsafe when the "parallel" grid axis is sharded across cores.
    inv_lhs = 1.0 / (rho1 * hth_ref[...] + rho2)

    # combined right-hand side, (B, hw)                      (VPU)
    y = rho1 * x0_ref[...] + rho2 * x1_ref[...]

    f2r = f2r_ref[...]
    f2i = f2i_ref[...]

    # forward 2-D DFT (fused) of the real input + freq-domain solve   (MXU)
    zr = jnp.dot(y, f2r, preferred_element_type=jnp.float32) * inv_lhs
    zi = jnp.dot(y, f2i, preferred_element_type=jnp.float32) * inv_lhs

    # inverse 2-D DFT, keep the real part only               (MXU)
    xr = (jnp.dot(zr, f2r, preferred_element_type=jnp.float32)
          + jnp.dot(zi, f2i, preferred_element_type=jnp.float32))

    out_ref[...] = (xr * (1.0 / hw)).astype(out_ref.dtype)


def _round_up(x, m):
    return (x + m - 1) // m * m


def x_update_pallas(x0, x1, hth, rho1, rho2):
    """x0, x1: (N, C, H, W) f32; hth: (1, 1, H, W) f32; rho1, rho2: scalars."""
    n, c, h, w = x0.shape
    bc = n * c
    hw = h * w
    # TODO(synk): for large images (h*w > ~2K) the fused (h*w)^2 DFT matrices
    # no longer fit comfortably in VMEM; switch back to the separable per-axis
    # (F_H @ Y @ F_W) form for that regime.

    # lane-dense layout: one flattened image per row (last dim = h*w)
    x0f = x0.reshape(bc, hw)
    x1f = x1.reshape(bc, hw)
    hthf = hth.reshape(1, hw)
    rho = jnp.asarray([rho1, rho2], dtype=jnp.float32)

    f2r, f2i = _fused_dft_2d(h, w)

    # Batch of images per grid step: amortizes the ~0.35us/step overhead and
    # gives MXU-sized matmuls.  Keep >= 2 grid steps when possible so both
    # v7x TensorCores get work.
    if bc >= 16:
        b = min(256, _round_up((bc + 1) // 2, 8))
    else:
        b = bc
    bc_pad = _round_up(bc, b)
    if bc_pad != bc:
        pad = bc_pad - bc
        x0f = jnp.pad(x0f, ((0, pad), (0, 0)))
        x1f = jnp.pad(x1f, ((0, pad), (0, 0)))

    grid = (bc_pad // b,)

    img_spec = pl.BlockSpec((b, hw), lambda i: (i, 0))
    fixed_row = pl.BlockSpec((1, hw), lambda i: (0, 0))
    fixed_mat = pl.BlockSpec((hw, hw), lambda i: (0, 0))

    kernel = functools.partial(_x_update_kernel, hw=hw)

    out = pl.pallas_call(
        kernel,
        out_shape=jax.ShapeDtypeStruct((bc_pad, hw), x0.dtype),
        grid=grid,
        in_specs=[
            pl.BlockSpec(memory_space=pltpu.MemorySpace.SMEM),  # rho1, rho2 scalars
            fixed_row,    # HtH, flattened to (1, hw)
            img_spec,     # x0
            img_spec,     # x1
            fixed_mat,    # fused 2-D DFT, real part
            fixed_mat,    # fused 2-D DFT, imag part
        ],
        out_specs=img_spec,
        compiler_params=pltpu.CompilerParams(
            dimension_semantics=("parallel",)),
    )(rho, hthf, x0f, x1f, f2r, f2i)

    return out[:bc].reshape(n, c, h, w)


def x_update_ref(x0, x1, hth, rho1, rho2):
    lhs = rho1 * hth + rho2
    rhs = jnp.fft.fftn(rho1 * x0 + rho2 * x1, axes=(2, 3))
    return jnp.real(jnp.fft.ifftn(rhs / lhs, axes=(2, 3))).astype(x0.dtype)


if __name__ == "__main__":
    key = jax.random.PRNGKey(0)
    k0, k1, k2 = jax.random.split(key, 3)

    N, C, H, W = 2, 4, 16, 16
    x0 = jax.random.normal(k0, (N, C, H, W), dtype=jnp.float32)
    x1 = jax.random.normal(k1, (N, C, H, W), dtype=jnp.float32)
    # HtH = |FFT2(h)|^2 of a synthetic blur kernel -> real, non-negative
    psf = jax.random.uniform(k2, (1, 1, H, W), dtype=jnp.float32)
    hth = jnp.abs(jnp.fft.fftn(psf, axes=(2, 3))) ** 2
    hth = hth.astype(jnp.float32)
    rho1 = 0.5
    rho2 = 1.2

    out = x_update_pallas(x0, x1, hth, rho1, rho2)
    jax.block_until_ready(out)

    ref = x_update_ref(x0, x1, hth, rho1, rho2)
    assert out.shape == (N, C, H, W)
    assert jnp.allclose(out, ref, rtol=1e-4, atol=1e-4), \
        f"max abs err = {float(jnp.max(jnp.abs(out - ref)))}"

    print("KERNEL_OK")
</pallas_src>

<mosaic_0001>
module attributes {stable_mosaic.version = 11 : i64} {
  func.func @_x_update_kernel(%arg0: i32, %arg1: memref<2xf32, #tpu.memory_space<smem>>, %arg2: memref<1x256xf32, #tpu.memory_space<vmem>>, %arg3: memref<8x256xf32, #tpu.memory_space<vmem>>, %arg4: memref<8x256xf32, #tpu.memory_space<vmem>>, %arg5: memref<256x256xf32, #tpu.memory_space<vmem>>, %arg6: memref<256x256xf32, #tpu.memory_space<vmem>>, %arg7: memref<8x256xf32, #tpu.memory_space<vmem>>) attributes {dimension_semantics = [#tpu.dimension_semantics<parallel>], iteration_bounds = array<i64: 1>, scalar_prefetch = 0 : i64, scratch_operands = 0 : i64, tpu.core_type = #tpu.core_type<tc>, window_params = [{transform_indices = @transform_0, window_bounds = array<i64: 2>}, {pipeline_mode = #tpu.pipeline_mode<synchronous>, transform_indices = @transform_1, window_bounds = array<i64: 1, 256>}, {transform_indices = @transform_2, window_bounds = array<i64: 8, 256>}, {transform_indices = @transform_3, window_bounds = array<i64: 8, 256>}, {pipeline_mode = #tpu.pipeline_mode<synchronous>, transform_indices = @transform_4, window_bounds = array<i64: 256, 256>}, {pipeline_mode = #tpu.pipeline_mode<synchronous>, transform_indices = @transform_5, window_bounds = array<i64: 256, 256>}, {transform_indices = @transform_6, window_bounds = array<i64: 8, 256>}]} {
    %c0 = arith.constant 0 : index
    %0 = memref.load %arg1[%c0] : memref<2xf32, #tpu.memory_space<smem>>
    %c1 = arith.constant 1 : index
    %1 = memref.load %arg1[%c1] : memref<2xf32, #tpu.memory_space<smem>>
    %c0_0 = arith.constant 0 : index
    %c0_1 = arith.constant 0 : index
    %2 = vector.load %arg2[%c0_0, %c0_1] : memref<1x256xf32, #tpu.memory_space<vmem>>, vector<1x256xf32>
    %3 = vector.broadcast %0 : f32 to vector<1x256xf32>
    %4 = arith.mulf %3, %2 : vector<1x256xf32>
    %5 = vector.broadcast %1 : f32 to vector<1x256xf32>
    %6 = arith.addf %4, %5 : vector<1x256xf32>
    %cst = arith.constant 1.000000e+00 : f32
    %7 = vector.broadcast %cst : f32 to vector<1x256xf32>
    %8 = arith.divf %7, %6 : vector<1x256xf32>
    %c0_2 = arith.constant 0 : index
    %c0_3 = arith.constant 0 : index
    %9 = vector.load %arg3[%c0_2, %c0_3] : memref<8x256xf32, #tpu.memory_space<vmem>>, vector<8x256xf32>
    %10 = vector.broadcast %0 : f32 to vector<8x256xf32>
    %11 = arith.mulf %10, %9 : vector<8x256xf32>
    %c0_4 = arith.constant 0 : index
    %c0_5 = arith.constant 0 : index
    %12 = vector.load %arg4[%c0_4, %c0_5] : memref<8x256xf32, #tpu.memory_space<vmem>>, vector<8x256xf32>
    %13 = vector.broadcast %1 : f32 to vector<8x256xf32>
    %14 = arith.mulf %13, %12 : vector<8x256xf32>
    %15 = arith.addf %11, %14 : vector<8x256xf32>
    %c0_6 = arith.constant 0 : index
    %c0_7 = arith.constant 0 : index
    %16 = vector.load %arg5[%c0_6, %c0_7] : memref<256x256xf32, #tpu.memory_space<vmem>>, vector<256x256xf32>
    %c0_8 = arith.constant 0 : index
    %c0_9 = arith.constant 0 : index
    %17 = vector.load %arg6[%c0_8, %c0_9] : memref<256x256xf32, #tpu.memory_space<vmem>>, vector<256x256xf32>
    %cst_10 = arith.constant dense<0.000000e+00> : vector<8x256xf32>
    %18 = tpu.matmul %15, %16, %cst_10 {dimension_numbers = #tpu.dot_dimension_numbers<[1], [0], [0], [1], [0, 0, 1, 1], [], []>} : vector<8x256xf32>, vector<256x256xf32>, vector<8x256xf32> -> vector<8x256xf32>
    %19 = vector.broadcast %8 : vector<1x256xf32> to vector<8x256xf32>
    %20 = arith.mulf %18, %19 : vector<8x256xf32>
    %cst_11 = arith.constant dense<0.000000e+00> : vector<8x256xf32>
    %21 = tpu.matmul %15, %17, %cst_11 {dimension_numbers = #tpu.dot_dimension_numbers<[1], [0], [0], [1], [0, 0, 1, 1], [], []>} : vector<8x256xf32>, vector<256x256xf32>, vector<8x256xf32> -> vector<8x256xf32>
    %22 = vector.broadcast %8 : vector<1x256xf32> to vector<8x256xf32>
    %23 = arith.mulf %21, %22 : vector<8x256xf32>
    %cst_12 = arith.constant dense<0.000000e+00> : vector<8x256xf32>
    %24 = tpu.matmul %20, %16, %cst_12 {dimension_numbers = #tpu.dot_dimension_numbers<[1], [0], [0], [1], [0, 0, 1, 1], [], []>} : vector<8x256xf32>, vector<256x256xf32>, vector<8x256xf32> -> vector<8x256xf32>
    %cst_13 = arith.constant dense<0.000000e+00> : vector<8x256xf32>
    %25 = tpu.matmul %23, %17, %cst_13 {dimension_numbers = #tpu.dot_dimension_numbers<[1], [0], [0], [1], [0, 0, 1, 1], [], []>} : vector<8x256xf32>, vector<256x256xf32>, vector<8x256xf32> -> vector<8x256xf32>
    %26 = arith.addf %24, %25 : vector<8x256xf32>
    %cst_14 = arith.constant 3.906250e-03 : f32
    %27 = vector.broadcast %cst_14 : f32 to vector<8x256xf32>
    %28 = arith.mulf %26, %27 : vector<8x256xf32>
    %c0_15 = arith.constant 0 : index
    %c0_16 = arith.constant 0 : index
    %29 = vector.load %arg7[%c0_15, %c0_16] : memref<8x256xf32, #tpu.memory_space<vmem>>, vector<8x256xf32>
    tpu.vector_store %arg7[%c0_15, %c0_16], %28 {strides = array<i32>} : memref<8x256xf32, #tpu.memory_space<vmem>>, vector<8x256xf32>,
    return
  }
  func.func @transform_0(%arg0: i32) -> i32 {
    %c0_i32 = arith.constant 0 : i32
    %c0_i32_0 = arith.constant 0 : i32
    return %c0_i32 : i32
  }
  func.func @transform_1(%arg0: i32) -> (i32, i32) {
    %c0_i32 = arith.constant 0 : i32
    %c0_i32_0 = arith.constant 0 : i32
    %c0_i32_1 = arith.constant 0 : i32
    return %c0_i32, %c0_i32_0 : i32, i32
  }
  func.func @transform_2(%arg0: i32) -> (i32, i32) {
    %c0_i32 = arith.constant 0 : i32
    %c0_i32_0 = arith.constant 0 : i32
    return %arg0, %c0_i32 : i32, i32
  }
  func.func @transform_3(%arg0: i32) -> (i32, i32) {
    %c0_i32 = arith.constant 0 : i32
    %c0_i32_0 = arith.constant 0 : i32
    return %arg0, %c0_i32 : i32, i32
  }
  func.func @transform_4(%arg0: i32) -> (i32, i32) {
    %c0_i32 = arith.constant 0 : i32
    %c0_i32_0 = arith.constant 0 : i32
    %c0_i32_1 = arith.constant 0 : i32
    return %c0_i32, %c0_i32_0 : i32, i32
  }
  func.func @transform_5(%arg0: i32) -> (i32, i32) {
    %c0_i32 = arith.constant 0 : i32
    %c0_i32_0 = arith.constant 0 : i32
    %c0_i32_1 = arith.constant 0 : i32
    return %c0_i32, %c0_i32_0 : i32, i32
  }
  func.func @transform_6(%arg0: i32) -> (i32, i32) {
    %c0_i32 = arith.constant 0 : i32
    %c0_i32_0 = arith.constant 0 : i32
    return %arg0, %c0_i32 : i32, i32
  }
}

</mosaic_0001>

<llo_original>
// kernel: tpu_custom_call.1
$region0: #{tpu_custom_call.1}
  #allocation0 [shape = 'u32[]', space=smem, size = 0x4, offset = 0x4, fixed_abs, tag = 'smem constant byte address 0x4 - core index']
  #allocation1 [shape = 'u32[72,128]{1,0:T(1,128)}', space=vmem, size = 0x9000, scoped, tag = 'internal scratch']
  %s0 = inlined_call_operand.hbm [shape: f32[2], index: 0, kind: input, shape index: {}]
  %s1 = inlined_call_operand.hbm [shape: f32[1,256], index: 1, kind: input, shape index: {}]
  %s2 = inlined_call_operand.hbm [shape: f32[8,256], index: 2, kind: input, shape index: {}]
  %s3 = inlined_call_operand.hbm [shape: f32[8,256], index: 3, kind: input, shape index: {}]
  %s4 = inlined_call_operand.hbm [shape: f32[256,256], index: 4, kind: input, shape index: {}]
  %s5 = inlined_call_operand.hbm [shape: f32[256,256], index: 5, kind: input, shape index: {}]
  %s6 = inlined_call_operand.hbm [shape: f32[8,256], index: 6, kind: output, shape index: {}]
  %s7 = sld [smem:[#allocation0]]
  $region58: #{tpu_custom_call.1} parent=0
    _
  %s9 = ssub.s32 1, %s7
  %s10 = scalar_select 0, %s9, %s7
  $region1: #{tpu_custom_call.1} parent=0
    #allocation2 [shape = 'u8[512]{0}', space=smem, size = 0x200, scoped, tag = 'input window, operand 0, single buffered']
    #allocation3 [shape = 's32[1]{0}', space=sflag, size = 0x4, scoped, tag = 'scoped memory for tpu_custom_call.1']
    #allocation4 [shape = 's32[1]{0}', space=sflag, size = 0x4, scoped, tag = 'scoped memory for tpu_custom_call.1']
    #allocation5 [shape = 's32[1]{0}', space=sflag, size = 0x4, scoped, tag = 'scoped memory for tpu_custom_call.1']
    #allocation6 [shape = 'u8[1024]{0}', space=vmem, size = 0x400, scoped, tag = 'input window, operand 1, single buffered']
    #allocation7 [shape = 'u8[8192]{0}', space=vmem, size = 0x2000, scoped, tag = 'input window, operand 2, single buffered']
    #allocation8 [shape = 's32[1]{0}', space=sflag, size = 0x4, scoped, tag = 'scoped memory for tpu_custom_call.1']
    #allocation9 [shape = 'u8[8192]{0}', space=vmem, size = 0x2000, scoped, tag = 'input window, operand 3, single buffered']
    #allocation10 [shape = 'u8[262144]{0}', space=vmem, size = 0x40000, scoped, tag = 'input window, operand 4, single buffered']
    #allocation11 [shape = 's32[1]{0}', space=sflag, size = 0x4, scoped, tag = 'scoped memory for tpu_custom_call.1']
    #allocation12 [shape = 'u8[262144]{0}', space=vmem, size = 0x40000, scoped, tag = 'input window, operand 5, single buffered']
    #allocation13 [shape = 'u8[8192]{0}', space=vmem, size = 0x2000, scoped, tag = 'output window, operand 0, single buffered']
    %11 = vsyncpa [#allocation5], 0
    %12 = vsyncpa [#allocation3], 0
    %13 = vsyncpa [#allocation8], 0
    %14 = vsyncpa [#allocation11], 0
    %15 = vsyncpa [#allocation4], 0
    // Predicated region
    $region2: #{tpu_custom_call.1} parent=1 // pred_check
      _
    $region3: #{tpu_custom_call.1} parent=1 // pred_check_branch
      %17 = sbr.rel (0) target = $region5
    $region4: #{tpu_custom_call.1} parent=1 // pred_region
      %19 = vsyncadd [#allocation5], 0
      %s21 = sshll.u32 %s0, 4
      %s22 = int_to_ptr.hbm [resolvable:$true] %s21
      %24 = dma.hbm_to_smem %s22, 16, [#allocation2], [#allocation5]
    $region5: #{tpu_custom_call.1} parent=1 // pred_fallthru
      _
    // Predicated region
    $region6: #{tpu_custom_call.1} parent=1 // pred_check
      _
    $region7: #{tpu_custom_call.1} parent=1 // pred_check_branch
      %26 = sbr.rel (0) target = $region9
    $region8: #{tpu_custom_call.1} parent=1 // pred_region
      %28 = vsyncadd [#allocation3], 0
      %s30 = sshll.u32 %s1, 4
      %s31 = int_to_ptr.hbm [resolvable:$true] %s30
      %s32 = sshll.u32 [#allocation6], 4
      %s33 = int_to_ptr.vmem [resolvable:$true] %s32
      %35 = dma.hbm_to_vmem [thread:$0]  %s31, 32, %s33, [#allocation3]
    $region9: #{tpu_custom_call.1} parent=1 // pred_fallthru
      _
    // Predicated region
    $region10: #{tpu_custom_call.1} parent=1 // pred_check
      _
    $region11: #{tpu_custom_call.1} parent=1 // pred_check_branch
      %37 = sbr.rel (0) target = $region13
    $region12: #{tpu_custom_call.1} parent=1 // pred_region
      %39 = vsyncadd [#allocation8], 0
      %s41 = sshll.u32 %s2, 4
      %s42 = int_to_ptr.hbm [resolvable:$true] %s41
      %s43 = sshll.u32 [#allocation7], 4
      %s44 = int_to_ptr.vmem [resolvable:$true] %s43
      %46 = dma.hbm_to_vmem [thread:$0]  %s42, 256, %s44, [#allocation8]
    $region13: #{tpu_custom_call.1} parent=1 // pred_fallthru
      _
    // Predicated region
    $region14: #{tpu_custom_call.1} parent=1 // pred_check
      _
    $region15: #{tpu_custom_call.1} parent=1 // pred_check_branch
      %48 = sbr.rel (0) target = $region17
    $region16: #{tpu_custom_call.1} parent=1 // pred_region
      %50 = vsyncadd [#allocation8], 0
      %s52 = sshll.u32 %s3, 4
      %s53 = int_to_ptr.hbm [resolvable:$true] %s52
      %s54 = sshll.u32 [#allocation9], 4
      %s55 = int_to_ptr.vmem [resolvable:$true] %s54
      %57 = dma.hbm_to_vmem [thread:$0]  %s53, 256, %s55, [#allocation8]
    $region17: #{tpu_custom_call.1} parent=1 // pred_fallthru
      _
    // Predicated region
    $region18: #{tpu_custom_call.1} parent=1 // pred_check
      _
    $region19: #{tpu_custom_call.1} parent=1 // pred_check_branch
      %59 = sbr.rel (0) target = $region21
    $region20: #{tpu_custom_call.1} parent=1 // pred_region
      %61 = vsyncadd [#allocation11], 0
      %s62 = sshll.u32 %s4, 4
      %s63 = int_to_ptr.hbm [resolvable:$true] %s62
      %s64 = sshll.u32 [#allocation10], 4
      %s65 = int_to_ptr.vmem [resolvable:$true] %s64
      %70 = dma.hbm_to_vmem [thread:$0]  %s63, 8192, %s65, [#allocation11], 256, 256, 16
    $region21: #{tpu_custom_call.1} parent=1 // pred_fallthru
      _
    // Predicated region
    $region22: #{tpu_custom_call.1} parent=1 // pred_check
      _
    $region23: #{tpu_custom_call.1} parent=1 // pred_check_branch
      %72 = sbr.rel (0) target = $region25
    $region24: #{tpu_custom_call.1} parent=1 // pred_region
      %74 = vsyncadd [#allocation11], 0
      %s75 = sshll.u32 %s5, 4
      %s76 = int_to_ptr.hbm [resolvable:$true] %s75
      %s77 = sshll.u32 [#allocation12], 4
      %s78 = int_to_ptr.vmem [resolvable:$true] %s77
      %83 = dma.hbm_to_vmem [thread:$0]  %s76, 8192, %s78, [#allocation11], 256, 256, 16
    $region25: #{tpu_custom_call.1} parent=1 // pred_fallthru
      _
    // Predicated region
    $region26: #{tpu_custom_call.1} parent=1 // pred_check
      _
    $region27: #{tpu_custom_call.1} parent=1 // pred_check_branch
      %85 = sbr.rel (0) target = $region29
    $region28: #{tpu_custom_call.1} parent=1 // pred_region
      %87 = dma.done [#allocation5], 16
    $region29: #{tpu_custom_call.1} parent=1 // pred_fallthru
      _
    // Predicated region
    $region30: #{tpu_custom_call.1} parent=1 // pred_check
      _
    $region31: #{tpu_custom_call.1} parent=1 // pred_check_branch
      %89 = sbr.rel (0) target = $region33
    $region32: #{tpu_custom_call.1} parent=1 // pred_region
      %91 = dma.done [#allocation3], 32
    $region33: #{tpu_custom_call.1} parent=1 // pred_fallthru
      _
    // Predicated region
    $region34: #{tpu_custom_call.1} parent=1 // pred_check
      _
    $region35: #{tpu_custom_call.1} parent=1 // pred_check_branch
      %93 = sbr.rel (0) target = $region37
    $region36: #{tpu_custom_call.1} parent=1 // pred_region
      %95 = dma.done [#allocation8], 256
    $region37: #{tpu_custom_call.1} parent=1 // pred_fallthru
      _
    // Predicated region
    $region38: #{tpu_custom_call.1} parent=1 // pred_check
      _
    $region39: #{tpu_custom_call.1} parent=1 // pred_check_branch
      %97 = sbr.rel (0) target = $region41
    $region40: #{tpu_custom_call.1} parent=1 // pred_region
      %99 = dma.done [#allocation8], 256
    $region41: #{tpu_custom_call.1} parent=1 // pred_fallthru
      _
    // Predicated region
    $region42: #{tpu_custom_call.1} parent=1 // pred_check
      _
    $region43: #{tpu_custom_call.1} parent=1 // pred_check_branch
      %101 = sbr.rel (0) target = $region45
    $region44: #{tpu_custom_call.1} parent=1 // pred_region
      %103 = dma.done [#allocation11], 8192
    $region45: #{tpu_custom_call.1} parent=1 // pred_fallthru
      _
    // Predicated region
    $region46: #{tpu_custom_call.1} parent=1 // pred_check
      _
    $region47: #{tpu_custom_call.1} parent=1 // pred_check_branch
      %105 = sbr.rel (0) target = $region49
    $region48: #{tpu_custom_call.1} parent=1 // pred_region
      %107 = dma.done [#allocation11], 8192
    $region49: #{tpu_custom_call.1} parent=1 // pred_fallthru
      _
    %108 = sfence
    %s109 = sld [smem:[#allocation2]]
    %s110 = sld [smem:[#allocation2 + $0x1]]
    %v111 = vld [vmem:[#allocation6] sm:$0x3]
    %v112 = vstv %s109
    %v113 = vmul.f32 %v112, %v111
    %v114 = vstv %s110
    %v115 = vadd.f32 %v113, %v114
    %v116 = vrcp.pop %v115
    %v117 = vmul.f32 %v115, %v116
    %v118 = vsub.f32 1.0, %v117
    %v119 = vmul.f32 %v116, %v118
    %v120 = vadd.f32 %v116, %v119
    %vm121 = vweird.f32 %v115
    %vm122 = vweird.f32 %v116
    %vm123 = vmor %vm121, %vm122
    %v124 = vsel %vm123, %v116, %v120
    %v125 = vand.u32 2147483647, %v115
    %vm126 = vcmp.eq.f32.partialorder %v125, 8.507059e+37
    %v127 = vand.u32 %v115, 2147483648
    %v128 = vor.u32 1.1754944e-38, %v127
    %v129 = vsel %vm126, %v128, %v124
    %v130 = vmul.f32 1.0, %v129
    %v131 = vld [vmem:[#allocation7] sm:$0xff]
    %v132 = vld [vmem:[#allocation7 + $0x8] sm:$0xff]
    %v133 = vmul.f32 %v112, %v131
    %v134 = vmul.f32 %v112, %v132
    %v135 = vld [vmem:[#allocation9] sm:$0xff]
    %v136 = vld [vmem:[#allocation9 + $0x8] sm:$0xff]
    %v137 = vmul.f32 %v114, %v135
    %v138 = vmul.f32 %v114, %v136
    %v139 = vadd.f32 %v133, %v137
    %v140 = vadd.f32 %v134, %v138
    %v141 = vld [vmem:[#allocation10] sm:$0xff]
    %v142 = vld [vmem:[#allocation10 + $0x8] sm:$0xff]
    %v143 = vld [vmem:[#allocation10 + $0x10] sm:$0xff]
    %v144 = vld [vmem:[#allocation10 + $0x18] sm:$0xff]
    %v145 = vld [vmem:[#allocation10 + $0x20] sm:$0xff]
    %v146 = vld [vmem:[#allocation10 + $0x28] sm:$0xff]
    %v147 = vld [vmem:[#allocation10 + $0x30] sm:$0xff]
    %v148 = vld [vmem:[#allocation10 + $0x38] sm:$0xff]
    %v149 = vld [vmem:[#allocation10 + $0x40] sm:$0xff]
    %v150 = vld [vmem:[#allocation10 + $0x48] sm:$0xff]
    %v151 = vld [vmem:[#allocation10 + $0x50] sm:$0xff]
    %v152 = vld [vmem:[#allocation10 + $0x58] sm:$0xff]
    %v153 = vld [vmem:[#allocation10 + $0x60] sm:$0xff]
    %v154 = vld [vmem:[#allocation10 + $0x68] sm:$0xff]
    %v155 = vld [vmem:[#allocation10 + $0x70] sm:$0xff]
    %v156 = vld [vmem:[#allocation10 + $0x78] sm:$0xff]
    %v157 = vld [vmem:[#allocation10 + $0x80] sm:$0xff]
    %v158 = vld [vmem:[#allocation10 + $0x88] sm:$0xff]
    %v159 = vld [vmem:[#allocation10 + $0x90] sm:$0xff]
    %v160 = vld [vmem:[#allocation10 + $0x98] sm:$0xff]
    %v161 = vld [vmem:[#allocation10 + $0xa0] sm:$0xff]
    %v162 = vld [vmem:[#allocation10 + $0xa8] sm:$0xff]
    %v163 = vld [vmem:[#allocation10 + $0xb0] sm:$0xff]
    %v164 = vld [vmem:[#allocation10 + $0xb8] sm:$0xff]
    %v165 = vld [vmem:[#allocation10 + $0xc0] sm:$0xff]
    %v166 = vld [vmem:[#allocation10 + $0xc8] sm:$0xff]
    %v167 = vld [vmem:[#allocation10 + $0xd0] sm:$0xff]
    %v168 = vld [vmem:[#allocation10 + $0xd8] sm:$0xff]
    %v169 = vld [vmem:[#allocation10 + $0xe0] sm:$0xff]
    %v170 = vld [vmem:[#allocation10 + $0xe8] sm:$0xff]
    %v171 = vld [vmem:[#allocation10 + $0xf0] sm:$0xff]
    %v172 = vld [vmem:[#allocation10 + $0xf8] sm:$0xff]
    %v173 = vld [vmem:[#allocation10 + $0x100] sm:$0xff]
    %v174 = vld [vmem:[#allocation10 + $0x108] sm:$0xff]
    %v175 = vld [vmem:[#allocation10 + $0x110] sm:$0xff]
    %v176 = vld [vmem:[#allocation10 + $0x118] sm:$0xff]
    %v177 = vld [vmem:[#allocation10 + $0x120] sm:$0xff]
    %v178 = vld [vmem:[#allocation10 + $0x128] sm:$0xff]
    %v179 = vld [vmem:[#allocation10 + $0x130] sm:$0xff]
    %v180 = vld [vmem:[#allocation10 + $0x138] sm:$0xff]
    %v181 = vld [vmem:[#allocation10 + $0x140] sm:$0xff]
    %v182 = vld [vmem:[#allocation10 + $0x148] sm:$0xff]
    %v183 = vld [vmem:[#allocation10 + $0x150] sm:$0xff]
    %v184 = vld [vmem:[#allocation10 + $0x158] sm:$0xff]
    %v185 = vld [vmem:[#allocation10 + $0x160] sm:$0xff]
    %v186 = vld [vmem:[#allocation10 + $0x168] sm:$0xff]
    %v187 = vld [vmem:[#allocation10 + $0x170] sm:$0xff]
    %v188 = vld [vmem:[#allocation10 + $0x178] sm:$0xff]
    %v189 = vld [vmem:[#allocation10 + $0x180] sm:$0xff]
    %v190 = vld [vmem:[#allocation10 + $0x188] sm:$0xff]
    %v191 = vld [vmem:[#allocation10 + $0x190] sm:$0xff]
    %v192 = vld [vmem:[#allocation10 + $0x198] sm:$0xff]
    %v193 = vld [vmem:[#allocation10 + $0x1a0] sm:$0xff]
    %v194 = vld [vmem:[#allocation10 + $0x1a8] sm:$0xff]
    %v195 = vld [vmem:[#allocation10 + $0x1b0] sm:$0xff]
    %v196 = vld [vmem:[#allocation10 + $0x1b8] sm:$0xff]
    %v197 = vld [vmem:[#allocation10 + $0x1c0] sm:$0xff]
    %v198 = vld [vmem:[#allocation10 + $0x1c8] sm:$0xff]
    %v199 = vld [vmem:[#allocation10 + $0x1d0] sm:$0xff]
    %v200 = vld [vmem:[#allocation10 + $0x1d8] sm:$0xff]
    %v201 = vld [vmem:[#allocation10 + $0x1e0] sm:$0xff]
    %v202 = vld [vmem:[#allocation10 + $0x1e8] sm:$0xff]
    %v203 = vld [vmem:[#allocation10 + $0x1f0] sm:$0xff]
    %v204 = vld [vmem:[#allocation10 + $0x1f8] sm:$0xff]
    %v205 = vld [vmem:[#allocation12] sm:$0xff]
    %v206 = vld [vmem:[#allocation12 + $0x8] sm:$0xff]
    %v207 = vld [vmem:[#allocation12 + $0x10] sm:$0xff]
    %v208 = vld [vmem:[#allocation12 + $0x18] sm:$0xff]
    %v209 = vld [vmem:[#allocation12 + $0x20] sm:$0xff]
    %v210 = vld [vmem:[#allocation12 + $0x28] sm:$0xff]
    %v211 = vld [vmem:[#allocation12 + $0x30] sm:$0xff]
    %v212 = vld [vmem:[#allocation12 + $0x38] sm:$0xff]
    %v213 = vld [vmem:[#allocation12 + $0x40] sm:$0xff]
    %v214 = vld [vmem:[#allocation12 + $0x48] sm:$0xff]
    %v215 = vld [vmem:[#allocation12 + $0x50] sm:$0xff]
    %v216 = vld [vmem:[#allocation12 + $0x58] sm:$0xff]
    %v217 = vld [vmem:[#allocation12 + $0x60] sm:$0xff]
    %v218 = vld [vmem:[#allocation12 + $0x68] sm:$0xff]
    %v219 = vld [vmem:[#allocation12 + $0x70] sm:$0xff]
    %v220 = vld [vmem:[#allocation12 + $0x78] sm:$0xff]
    %v221 = vld [vmem:[#allocation12 + $0x80] sm:$0xff]
    %v222 = vld [vmem:[#allocation12 + $0x88] sm:$0xff]
    %v223 = vld [vmem:[#allocation12 + $0x90] sm:$0xff]
    %v224 = vld [vmem:[#allocation12 + $0x98] sm:$0xff]
    %v225 = vld [vmem:[#allocation12 + $0xa0] sm:$0xff]
    %v226 = vld [vmem:[#allocation12 + $0xa8] sm:$0xff]
    %v227 = vld [vmem:[#allocation12 + $0xb0] sm:$0xff]
    %v228 = vld [vmem:[#allocation12 + $0xb8] sm:$0xff]
    %v229 = vld [vmem:[#allocation12 + $0xc0] sm:$0xff]
    %v230 = vld [vmem:[#allocation12 + $0xc8] sm:$0xff]
    %v231 = vld [vmem:[#allocation12 + $0xd0] sm:$0xff]
    %v232 = vld [vmem:[#allocation12 + $0xd8] sm:$0xff]
    %v233 = vld [vmem:[#allocation12 + $0xe0] sm:$0xff]
    %v234 = vld [vmem:[#allocation12 + $0xe8] sm:$0xff]
    %v235 = vld [vmem:[#allocation12 + $0xf0] sm:$0xff]
    %v236 = vld [vmem:[#allocation12 + $0xf8] sm:$0xff]
    %v237 = vld [vmem:[#allocation12 + $0x100] sm:$0xff]
    %v238 = vld [vmem:[#allocation12 + $0x108] sm:$0xff]
    %v239 = vld [vmem:[#allocation12 + $0x110] sm:$0xff]
    %v240 = vld [vmem:[#allocation12 + $0x118] sm:$0xff]
    %v241 = vld [vmem:[#allocation12 + $0x120] sm:$0xff]
    %v242 = vld [vmem:[#allocation12 + $0x128] sm:$0xff]
    %v243 = vld [vmem:[#allocation12 + $0x130] sm:$0xff]
    %v244 = vld [vmem:[#allocation12 + $0x138] sm:$0xff]
    %v245 = vld [vmem:[#allocation12 + $0x140] sm:$0xff]
    %v246 = vld [vmem:[#allocation12 + $0x148] sm:$0xff]
    %v247 = vld [vmem:[#allocation12 + $0x150] sm:$0xff]
    %v248 = vld [vmem:[#allocation12 + $0x158] sm:$0xff]
    %v249 = vld [vmem:[#allocation12 + $0x160] sm:$0xff]
    %v250 = vld [vmem:[#allocation12 + $0x168] sm:$0xff]
    %v251 = vld [vmem:[#allocation12 + $0x170] sm:$0xff]
    %v252 = vld [vmem:[#allocation12 + $0x178] sm:$0xff]
    %v253 = vld [vmem:[#allocation12 + $0x180] sm:$0xff]
    %v254 = vld [vmem:[#allocation12 + $0x188] sm:$0xff]
    %v255 = vld [vmem:[#allocation12 + $0x190] sm:$0xff]
    %v256 = vld [vmem:[#allocation12 + $0x198] sm:$0xff]
    %v257 = vld [vmem:[#allocation12 + $0x1a0] sm:$0xff]
    %v258 = vld [vmem:[#allocation12 + $0x1a8] sm:$0xff]
    %v259 = vld [vmem:[#allocation12 + $0x1b0] sm:$0xff]
    %v260 = vld [vmem:[#allocation12 + $0x1b8] sm:$0xff]
    %v261 = vld [vmem:[#allocation12 + $0x1c0] sm:$0xff]
    %v262 = vld [vmem:[#allocation12 + $0x1c8] sm:$0xff]
    %v263 = vld [vmem:[#allocation12 + $0x1d0] sm:$0xff]
    %v264 = vld [vmem:[#allocation12 + $0x1d8] sm:$0xff]
    %v265 = vld [vmem:[#allocation12 + $0x1e0] sm:$0xff]
    %v266 = vld [vmem:[#allocation12 + $0x1e8] sm:$0xff]
    %v267 = vld [vmem:[#allocation12 + $0x1f0] sm:$0xff]
    %v268 = vld [vmem:[#allocation12 + $0x1f8] sm:$0xff]
    %269 = vmatpush.msra.mxu0 %v171
    %270 = vmatpush.msra.mxu0 %v169
    %271 = vmatpush.msra.mxu0 %v167
    %272 = vmatpush.msra.mxu0 %v165
    %273 = vmatpush.msra.mxu0 %v163
    %274 = vmatpush.msra.mxu0 %v161
    %275 = vmatpush.msra.mxu0 %v159
    %276 = vmatpush.msra.mxu0 %v157
    %277 = vmatpush.msra.mxu0 %v155
    %278 = vmatpush.msra.mxu0 %v153
    %279 = vmatpush.msra.mxu0 %v151
    %280 = vmatpush.msra.mxu0 %v149
    %281 = vmatpush.msra.mxu0 %v147
    %282 = vmatpush.msra.mxu0 %v145
    %283 = vmatpush.msra.mxu0 %v143
    %284 = vmatpush.msra.mxu0 %v141
    %285 = vmatmul.f32.gmra.mxu0 %v139
    %v286 = vpop.f32.mrf.mxu0
    %v287 = vadd.f32 0.0, %v286
    %288 = vdwg.mxu0
    %289 = vmatpush.msra.mxu0 %v203
    %290 = vmatpush.msra.mxu0 %v201
    %291 = vmatpush.msra.mxu0 %v199
    %292 = vmatpush.msra.mxu0 %v197
    %293 = vmatpush.msra.mxu0 %v195
    %294 = vmatpush.msra.mxu0 %v193
    %295 = vmatpush.msra.mxu0 %v191
    %296 = vmatpush.msra.mxu0 %v189
    %297 = vmatpush.msra.mxu0 %v187
    %298 = vmatpush.msra.mxu0 %v185
    %299 = vmatpush.msra.mxu0 %v183
    %300 = vmatpush.msra.mxu0 %v181
    %301 = vmatpush.msra.mxu0 %v179
    %302 = vmatpush.msra.mxu0 %v177
    %303 = vmatpush.msra.mxu0 %v175
    %304 = vmatpush.msra.mxu0 %v173
    %305 = vmatmul.f32.gmra.mxu0 %v140
    %v306 = vpop.f32.mrf.mxu0
    %v307 = vadd.f32 %v287, %v306
    %308 = vdwg.mxu0
    %309 = vmatpush.msra.mxu0 %v172
    %310 = vmatpush.msra.mxu0 %v170
    %311 = vmatpush.msra.mxu0 %v168
    %312 = vmatpush.msra.mxu0 %v166
    %313 = vmatpush.msra.mxu0 %v164
    %314 = vmatpush.msra.mxu0 %v162
    %315 = vmatpush.msra.mxu0 %v160
    %316 = vmatpush.msra.mxu0 %v158
    %317 = vmatpush.msra.mxu0 %v156
    %318 = vmatpush.msra.mxu0 %v154
    %319 = vmatpush.msra.mxu0 %v152
    %320 = vmatpush.msra.mxu0 %v150
    %321 = vmatpush.msra.mxu0 %v148
    %322 = vmatpush.msra.mxu0 %v146
    %323 = vmatpush.msra.mxu0 %v144
    %324 = vmatpush.msra.mxu0 %v142
    %325 = vmatmul.f32.gmra.mxu0 %v139
    %v326 = vpop.f32.mrf.mxu0
    %v327 = vadd.f32 0.0, %v326
    %328 = vdwg.mxu0
    %329 = vmatpush.msra.mxu0 %v204
    %330 = vmatpush.msra.mxu0 %v202
    %331 = vmatpush.msra.mxu0 %v200
    %332 = vmatpush.msra.mxu0 %v198
    %333 = vmatpush.msra.mxu0 %v196
    %334 = vmatpush.msra.mxu0 %v194
    %335 = vmatpush.msra.mxu0 %v192
    %336 = vmatpush.msra.mxu0 %v190
    %337 = vmatpush.msra.mxu0 %v188
    %338 = vmatpush.msra.mxu0 %v186
    %339 = vmatpush.msra.mxu0 %v184
    %340 = vmatpush.msra.mxu0 %v182
    %341 = vmatpush.msra.mxu0 %v180
    %342 = vmatpush.msra.mxu0 %v178
    %343 = vmatpush.msra.mxu0 %v176
    %344 = vmatpush.msra.mxu0 %v174
    %345 = vmatmul.f32.gmra.mxu0 %v140
    %v346 = vpop.f32.mrf.mxu0
    %v347 = vadd.f32 %v327, %v346
    %348 = vdwg.mxu0
    %v350 = vperm.slane %v130, 0
    %v351 = vperm.slane %v130, 1
    %v354 = vmul.f32 %v307, %v350
    %v355 = vmul.f32 %v347, %v351
    %356 = vmatpush.msra.mxu0 %v235
    %357 = vmatpush.msra.mxu0 %v233
    %358 = vmatpush.msra.mxu0 %v231
    %359 = vmatpush.msra.mxu0 %v229
    %360 = vmatpush.msra.mxu0 %v227
    %361 = vmatpush.msra.mxu0 %v225
    %362 = vmatpush.msra.mxu0 %v223
    %363 = vmatpush.msra.mxu0 %v221
    %364 = vmatpush.msra.mxu0 %v219
    %365 = vmatpush.msra.mxu0 %v217
    %366 = vmatpush.msra.mxu0 %v215
    %367 = vmatpush.msra.mxu0 %v213
    %368 = vmatpush.msra.mxu0 %v211
    %369 = vmatpush.msra.mxu0 %v209
    %370 = vmatpush.msra.mxu0 %v207
    %371 = vmatpush.msra.mxu0 %v205
    %372 = vmatmul.f32.gmra.mxu0 %v139
    %v373 = vpop.f32.mrf.mxu0
    %v374 = vadd.f32 0.0, %v373
    %375 = vdwg.mxu0
    %376 = vmatpush.msra.mxu0 %v267
    %377 = vmatpush.msra.mxu0 %v265
    %378 = vmatpush.msra.mxu0 %v263
    %379 = vmatpush.msra.mxu0 %v261
    %380 = vmatpush.msra.mxu0 %v259
    %381 = vmatpush.msra.mxu0 %v257
    %382 = vmatpush.msra.mxu0 %v255
    %383 = vmatpush.msra.mxu0 %v253
    %384 = vmatpush.msra.mxu0 %v251
    %385 = vmatpush.msra.mxu0 %v249
    %386 = vmatpush.msra.mxu0 %v247
    %387 = vmatpush.msra.mxu0 %v245
    %388 = vmatpush.msra.mxu0 %v243
    %389 = vmatpush.msra.mxu0 %v241
    %390 = vmatpush.msra.mxu0 %v239
    %391 = vmatpush.msra.mxu0 %v237
    %392 = vmatmul.f32.gmra.mxu0 %v140
    %v393 = vpop.f32.mrf.mxu0
    %v394 = vadd.f32 %v374, %v393
    %395 = vdwg.mxu0
    %396 = vmatpush.msra.mxu0 %v236
    %397 = vmatpush.msra.mxu0 %v234
    %398 = vmatpush.msra.mxu0 %v232
    %399 = vmatpush.msra.mxu0 %v230
    %400 = vmatpush.msra.mxu0 %v228
    %401 = vmatpush.msra.mxu0 %v226
    %402 = vmatpush.msra.mxu0 %v224
    %403 = vmatpush.msra.mxu0 %v222
    %404 = vmatpush.msra.mxu0 %v220
    %405 = vmatpush.msra.mxu0 %v218
    %406 = vmatpush.msra.mxu0 %v216
    %407 = vmatpush.msra.mxu0 %v214
    %408 = vmatpush.msra.mxu0 %v212
    %409 = vmatpush.msra.mxu0 %v210
    %410 = vmatpush.msra.mxu0 %v208
    %411 = vmatpush.msra.mxu0 %v206
    %412 = vmatmul.f32.gmra.mxu0 %v139
    %v413 = vpop.f32.mrf.mxu0
    %v414 = vadd.f32 0.0, %v413
    %415 = vdwg.mxu0
    %416 = vmatpush.msra.mxu0 %v268
    %417 = vmatpush.msra.mxu0 %v266
    %418 = vmatpush.msra.mxu0 %v264
    %419 = vmatpush.msra.mxu0 %v262
    %420 = vmatpush.msra.mxu0 %v260
    %421 = vmatpush.msra.mxu0 %v258
    %422 = vmatpush.msra.mxu0 %v256
    %423 = vmatpush.msra.mxu0 %v254
    %424 = vmatpush.msra.mxu0 %v252
    %425 = vmatpush.msra.mxu0 %v250
    %426 = vmatpush.msra.mxu0 %v248
    %427 = vmatpush.msra.mxu0 %v246
    %428 = vmatpush.msra.mxu0 %v244
    %429 = vmatpush.msra.mxu0 %v242
    %430 = vmatpush.msra.mxu0 %v240
    %431 = vmatpush.msra.mxu0 %v238
    %432 = vmatmul.f32.gmra.mxu0 %v140
    %v433 = vpop.f32.mrf.mxu0
    %v434 = vadd.f32 %v414, %v433
    %435 = vdwg.mxu0
    %v436 = vmul.f32 %v394, %v350
    %v437 = vmul.f32 %v434, %v351
    %438 = vmatpush.msra.mxu0 %v235
    %439 = vmatpush.msra.mxu0 %v233
    %440 = vmatpush.msra.mxu0 %v231
    %441 = vmatpush.msra.mxu0 %v229
    %442 = vmatpush.msra.mxu0 %v227
    %443 = vmatpush.msra.mxu0 %v225
    %444 = vmatpush.msra.mxu0 %v223
    %445 = vmatpush.msra.mxu0 %v221
    %446 = vmatpush.msra.mxu0 %v219
    %447 = vmatpush.msra.mxu0 %v217
    %448 = vmatpush.msra.mxu0 %v215
    %449 = vmatpush.msra.mxu0 %v213
    %450 = vmatpush.msra.mxu0 %v211
    %451 = vmatpush.msra.mxu0 %v209
    %452 = vmatpush.msra.mxu0 %v207
    %453 = vmatpush.msra.mxu0 %v205
    %454 = vmatmul.f32.gmra.mxu0 %v436
    %v455 = vpop.f32.mrf.mxu0
    %v456 = vadd.f32 0.0, %v455
    %457 = vdwg.mxu0
    %458 = vmatpush.msra.mxu0 %v267
    %459 = vmatpush.msra.mxu0 %v265
    %460 = vmatpush.msra.mxu0 %v263
    %461 = vmatpush.msra.mxu0 %v261
    %462 = vmatpush.msra.mxu0 %v259
    %463 = vmatpush.msra.mxu0 %v257
    %464 = vmatpush.msra.mxu0 %v255
    %465 = vmatpush.msra.mxu0 %v253
    %466 = vmatpush.msra.mxu0 %v251
    %467 = vmatpush.msra.mxu0 %v249
    %468 = vmatpush.msra.mxu0 %v247
    %469 = vmatpush.msra.mxu0 %v245
    %470 = vmatpush.msra.mxu0 %v243
    %471 = vmatpush.msra.mxu0 %v241
    %472 = vmatpush.msra.mxu0 %v239
    %473 = vmatpush.msra.mxu0 %v237
    %474 = vmatmul.f32.gmra.mxu0 %v437
    %v475 = vpop.f32.mrf.mxu0
    %v476 = vadd.f32 %v456, %v475
    %477 = vdwg.mxu0
    %478 = vmatpush.msra.mxu0 %v236
    %479 = vmatpush.msra.mxu0 %v234
    %480 = vmatpush.msra.mxu0 %v232
    %481 = vmatpush.msra.mxu0 %v230
    %482 = vmatpush.msra.mxu0 %v228
    %483 = vmatpush.msra.mxu0 %v226
    %484 = vmatpush.msra.mxu0 %v224
    %485 = vmatpush.msra.mxu0 %v222
    %486 = vmatpush.msra.mxu0 %v220
    %487 = vmatpush.msra.mxu0 %v218
    %488 = vmatpush.msra.mxu0 %v216
    %489 = vmatpush.msra.mxu0 %v214
    %490 = vmatpush.msra.mxu0 %v212
    %491 = vmatpush.msra.mxu0 %v210
    %492 = vmatpush.msra.mxu0 %v208
    %493 = vmatpush.msra.mxu0 %v206
    %494 = vmatmul.f32.gmra.mxu0 %v436
    %v495 = vpop.f32.mrf.mxu0
    %v496 = vadd.f32 0.0, %v495
    %497 = vdwg.mxu0
    %498 = vmatpush.msra.mxu0 %v268
    %499 = vmatpush.msra.mxu0 %v266
    %500 = vmatpush.msra.mxu0 %v264
    %501 = vmatpush.msra.mxu0 %v262
    %502 = vmatpush.msra.mxu0 %v260
    %503 = vmatpush.msra.mxu0 %v258
    %504 = vmatpush.msra.mxu0 %v256
    %505 = vmatpush.msra.mxu0 %v254
    %506 = vmatpush.msra.mxu0 %v252
    %507 = vmatpush.msra.mxu0 %v250
    %508 = vmatpush.msra.mxu0 %v248
    %509 = vmatpush.msra.mxu0 %v246
    %510 = vmatpush.msra.mxu0 %v244
    %511 = vmatpush.msra.mxu0 %v242
    %512 = vmatpush.msra.mxu0 %v240
    %513 = vmatpush.msra.mxu0 %v238
    %514 = vmatmul.f32.gmra.mxu0 %v437
    %v515 = vpop.f32.mrf.mxu0
    %v516 = vadd.f32 %v496, %v515
    %517 = vdwg.mxu0
    %518 = vmatpush.msra.mxu0 %v171
    %519 = vmatpush.msra.mxu0 %v169
    %520 = vmatpush.msra.mxu0 %v167
    %521 = vmatpush.msra.mxu0 %v165
    %522 = vmatpush.msra.mxu0 %v163
    %523 = vmatpush.msra.mxu0 %v161
    %524 = vmatpush.msra.mxu0 %v159
    %525 = vmatpush.msra.mxu0 %v157
    %526 = vmatpush.msra.mxu0 %v155
    %527 = vmatpush.msra.mxu0 %v153
    %528 = vmatpush.msra.mxu0 %v151
    %529 = vmatpush.msra.mxu0 %v149
    %530 = vmatpush.msra.mxu0 %v147
    %531 = vmatpush.msra.mxu0 %v145
    %532 = vmatpush.msra.mxu0 %v143
    %533 = vmatpush.msra.mxu0 %v141
    %534 = vmatmul.f32.gmra.mxu0 %v354
    %v535 = vpop.f32.mrf.mxu0
    %v536 = vadd.f32 %v476, %v535
    %537 = vdwg.mxu0
    %538 = vmatpush.msra.mxu0 %v203
    %539 = vmatpush.msra.mxu0 %v201
    %540 = vmatpush.msra.mxu0 %v199
    %541 = vmatpush.msra.mxu0 %v197
    %542 = vmatpush.msra.mxu0 %v195
    %543 = vmatpush.msra.mxu0 %v193
    %544 = vmatpush.msra.mxu0 %v191
    %545 = vmatpush.msra.mxu0 %v189
    %546 = vmatpush.msra.mxu0 %v187
    %547 = vmatpush.msra.mxu0 %v185
    %548 = vmatpush.msra.mxu0 %v183
    %549 = vmatpush.msra.mxu0 %v181
    %550 = vmatpush.msra.mxu0 %v179
    %551 = vmatpush.msra.mxu0 %v177
    %552 = vmatpush.msra.mxu0 %v175
    %553 = vmatpush.msra.mxu0 %v173
    %554 = vmatmul.f32.gmra.mxu0 %v355
    %v555 = vpop.f32.mrf.mxu0
    %v556 = vadd.f32 %v536, %v555
    %557 = vdwg.mxu0
    %558 = vmatpush.msra.mxu0 %v172
    %559 = vmatpush.msra.mxu0 %v170
    %560 = vmatpush.msra.mxu0 %v168
    %561 = vmatpush.msra.mxu0 %v166
    %562 = vmatpush.msra.mxu0 %v164
    %563 = vmatpush.msra.mxu0 %v162
    %564 = vmatpush.msra.mxu0 %v160
    %565 = vmatpush.msra.mxu0 %v158
    %566 = vmatpush.msra.mxu0 %v156
    %567 = vmatpush.msra.mxu0 %v154
    %568 = vmatpush.msra.mxu0 %v152
    %569 = vmatpush.msra.mxu0 %v150
    %570 = vmatpush.msra.mxu0 %v148
    %571 = vmatpush.msra.mxu0 %v146
    %572 = vmatpush.msra.mxu0 %v144
    %573 = vmatpush.msra.mxu0 %v142
    %574 = vmatmul.f32.gmra.mxu0 %v354
    %v575 = vpop.f32.mrf.mxu0
    %v576 = vadd.f32 %v516, %v575
    %577 = vdwg.mxu0
    %578 = vmatpush.msra.mxu0 %v204
    %579 = vmatpush.msra.mxu0 %v202
    %580 = vmatpush.msra.mxu0 %v200
    %581 = vmatpush.msra.mxu0 %v198
    %582 = vmatpush.msra.mxu0 %v196
    %583 = vmatpush.msra.mxu0 %v194
    %584 = vmatpush.msra.mxu0 %v192
    %585 = vmatpush.msra.mxu0 %v190
    %586 = vmatpush.msra.mxu0 %v188
    %587 = vmatpush.msra.mxu0 %v186
    %588 = vmatpush.msra.mxu0 %v184
    %589 = vmatpush.msra.mxu0 %v182
    %590 = vmatpush.msra.mxu0 %v180
    %591 = vmatpush.msra.mxu0 %v178
    %592 = vmatpush.msra.mxu0 %v176
    %593 = vmatpush.msra.mxu0 %v174
    %594 = vmatmul.f32.gmra.mxu0 %v355
    %v595 = vpop.f32.mrf.mxu0
    %v596 = vadd.f32 %v576, %v595
    %597 = vdwg.mxu0
    %v598 = vmul.f32 %v556, 0.00390625
    %v599 = vmul.f32 %v596, 0.00390625
    %600 = vst [vmem:[#allocation13] sm:$0xff] %v598
    %601 = vst [vmem:[#allocation13 + $0x8] sm:$0xff] %v599
    // Predicated region
    $region50: #{tpu_custom_call.1} parent=1 // pred_check
      _
    $region51: #{tpu_custom_call.1} parent=1 // pred_check_branch
      %603 = sbr.rel (0) target = $region53
    $region52: #{tpu_custom_call.1} parent=1 // pred_region
      %605 = vsyncadd [#allocation4], 0
      %s607 = sshll.u32 [#allocation13], 4
      %s608 = int_to_ptr.vmem [resolvable:$true] %s607
      %s609 = sshll.u32 %s6, 4
      %s610 = int_to_ptr.hbm [resolvable:$true] %s609
      %612 = dma.vmem_to_hbm [thread:$0]  %s608, 256, %s610, [#allocation4]
    $region53: #{tpu_custom_call.1} parent=1 // pred_fallthru
      _
    // Predicated region
    $region54: #{tpu_custom_call.1} parent=1 // pred_check
      _
    $region55: #{tpu_custom_call.1} parent=1 // pred_check_branch
      %614 = sbr.rel (0) target = $region57
    $region56: #{tpu_custom_call.1} parent=1 // pred_region
      %616 = dma.done [#allocation4], 256
    $region57: #{tpu_custom_call.1} parent=1 // pred_fallthru
      _
    %617 = vsyncpa [#allocation3], 1
    %618 = vsyncpa [#allocation8], 1
    %619 = vsyncpa [#allocation11], 1
    %620 = vsyncpa [#allocation4], 1
    %621 = vsyncpa [#allocation5], 1

</llo_original>
